<compile_context>
chip_gen: v5e
topology: v5e:2x2
jax: 0.10.0
libtpu: 0.0.40
codegen_flags: <defaults>
</compile_context>

<pallas_src>
import jax
import jax.numpy as jnp
from jax.experimental import pallas as pl
from jax.experimental.pallas import tpu as pltpu

DIM = 384          # `dimension` in the reference module
HID = DIM // 2     # 192
LN_EPS = 1e-5      # torch.nn.LayerNorm default eps


def _round_up(x, m):
    return (x + m - 1) // m * m


def _head_kernel(x_ref, w1_ref, b1_ref, w2_ref, b2_ref, o_ref):
    """Fused LayerNorm -> Linear(384,192) -> ReLU -> Linear(192,1) for one batch tile.

    LayerNorm affine (gamma/beta) is folded into w1/b1 offline; dropout is identity in eval.
    """
    x = x_ref[...].astype(jnp.float32)                 # [TB, 384]; bf16 in HBM -> f32 in vregs

    # --- LayerNorm statistics in f32 (two-pass, matches torch numerics) ---
    mean = jnp.mean(x, axis=-1, keepdims=True)
    xc = x - mean
    var = jnp.mean(xc * xc, axis=-1, keepdims=True)
    xn = xc * jax.lax.rsqrt(var + LN_EPS)              # [TB, 384]

    # --- Linear 384 -> 192 (LN affine pre-folded) + ReLU: bf16 on the MXU, f32 accumulation ---
    h = jnp.dot(xn.astype(jnp.bfloat16), w1_ref[...],
                preferred_element_type=jnp.float32) + b1_ref[...]
    h = jnp.maximum(h, 0.0)                            # [TB, 192] f32

    # --- Linear 192 -> 1 as VPU multiply + lane reduction (avoid an N=1 MXU GEMM) ---
    y = jnp.sum(h * w2_ref[...], axis=-1, keepdims=True) + b2_ref[0]
    o_ref[...] = y.astype(o_ref.dtype)                 # [TB, 1]


def _choose_block_b(B, block_b):
    """Batch tile: multiple of 16 (bf16 packing), <= 1024, >= ~128 when B allows, and sized so
    large B gets >= 4 grid steps (v7x megacore needs >= 2 'parallel' steps)."""
    if B <= 16:
        return B                              # single full block (block == array dims)
    cap = (B // 16) * 16                      # largest multiple of 16 not exceeding B
    if block_b is not None:
        want = _round_up(block_b, 16)
    else:
        want = min(1024, max(128, _round_up(pl.cdiv(B, 4), 16)))
    return max(16, min(want, cap))


def clit_head(pooled, w1f, b1f, w2_row, b2, *, block_b=None):
    """pooled: [B, 384] bf16 preferred (f32 accepted). Returns [B, 1] f32.

    w1f:    [384, 192] bf16  LN-affine-folded, transposed torch Linear weight
    b1f:    [1, 192]   f32   LN-affine-folded bias
    w2_row: [1, 192]   f32   regressor weight as a row (VPU reduce)
    b2:     [1]        f32   regressor bias (SMEM scalar)
    """
    B = pooled.shape[0]
    TB = _choose_block_b(B, block_b)
    grid = (pl.cdiv(B, TB),)   # no jnp.pad round-trip: trailing partial tile is masked by Pallas

    return pl.pallas_call(
        _head_kernel,
        out_shape=jax.ShapeDtypeStruct((B, 1), jnp.float32),
        grid=grid,
        in_specs=[
            pl.BlockSpec((TB, DIM), lambda i: (i, 0)),    # pooled tile (pipelined over batch)
            pl.BlockSpec((DIM, HID), lambda i: (0, 0)),   # w1f    (VMEM-resident, bf16)
            pl.BlockSpec((1, HID), lambda i: (0, 0)),     # b1f    (resident)
            pl.BlockSpec((1, HID), lambda i: (0, 0)),     # w2_row (resident)
            pl.BlockSpec(memory_space=pltpu.MemorySpace.SMEM),  # b2 scalar in SMEM
        ],
        out_specs=pl.BlockSpec((TB, 1), lambda i: (i, 0)),
        compiler_params=pltpu.CompilerParams(
            # v7x: shard batch tiles across the 2 TensorCores. Scoped-VMEM default (16/32 MiB)
            # is ample for TB <= 1024, so no custom vmem_limit_bytes.
            dimension_semantics=("parallel",),
        ),
    )(pooled, w1f, b1f, w2_row, b2)


def prepare_head_params(gamma, beta, w1, b1, w2, b2):
    """Torch-layout params -> kernel params, folding the LayerNorm affine into Linear1.

    gamma, beta: [384]        LayerNorm weight / bias
    w1: [192, 384], b1: [192] torch Linear(384,192) (weight stored [out, in])
    w2: [1, 192],   b2: [1]   torch Linear(192,1)
    """
    gamma = gamma.reshape(-1).astype(jnp.float32)
    beta = beta.reshape(-1).astype(jnp.float32)
    w1_t = w1.T.astype(jnp.float32)                                  # [384, 192]
    # (xn*gamma + beta) @ W1^T + b1  ==  xn @ (gamma[:,None] * W1^T) + (beta @ W1^T + b1)
    w1f = (w1_t * gamma[:, None]).astype(jnp.bfloat16)               # [384, 192] bf16 for MXU
    b1f = (beta[None, :] @ w1_t + b1.reshape(1, -1)).astype(jnp.float32)   # [1, 192]
    w2_row = w2.reshape(1, -1).astype(jnp.float32)                   # [1, 192]
    b2 = b2.reshape(-1).astype(jnp.float32)                          # [1]
    return w1f, b1f, w2_row, b2


def _reference_policy(pooled, w1f, b1f, w2_row, b2):
    """Pure-JAX reference mirroring the kernel's precision policy (bf16 input + bf16 matmul)."""
    x = pooled.astype(jnp.float32)
    mean = jnp.mean(x, axis=-1, keepdims=True)
    xc = x - mean
    var = jnp.mean(xc * xc, axis=-1, keepdims=True)
    xn = xc * jax.lax.rsqrt(var + LN_EPS)
    h = jnp.maximum(
        jnp.dot(xn.astype(w1f.dtype), w1f, preferred_element_type=jnp.float32) + b1f, 0.0)
    return jnp.sum(h * w2_row, axis=-1, keepdims=True) + b2[0]


def _reference_torch(pooled_f32, gamma, beta, w1, b1, w2, b2):
    """Exact f32 math of the torch head (LayerNorm -> Linear -> ReLU -> Linear)."""
    x = pooled_f32.astype(jnp.float32)
    mean = jnp.mean(x, axis=-1, keepdims=True)
    var = jnp.mean((x - mean) ** 2, axis=-1, keepdims=True)
    xn = (x - mean) * jax.lax.rsqrt(var + LN_EPS) * gamma.reshape(1, -1) + beta.reshape(1, -1)
    h = jnp.maximum(xn @ w1.T + b1.reshape(1, -1), 0.0)
    return h @ w2.T + b2.reshape(1, -1)


if __name__ == "__main__":
    key = jax.random.PRNGKey(0)
    k_pool, k_w1, k_b1, k_w2, k_b2, k_pool2, k_g, k_bt = jax.random.split(key, 8)

    B = 8  # small batch

    # Deterministic stand-in for the pretrained backbone's pooled output [B, 384].
    pooled_f32 = jax.random.normal(k_pool, (B, DIM), dtype=jnp.float32)
    pooled = pooled_f32.astype(jnp.bfloat16)   # bf16 at the producer: halves HBM read traffic

    # LayerNorm params (made non-trivial to exercise the affine folding).
    gamma = 1.0 + 0.1 * jax.random.normal(k_g, (DIM,), dtype=jnp.float32)
    beta = 0.1 * jax.random.normal(k_bt, (DIM,), dtype=jnp.float32)

    # Linear(384 -> 192): torch stores weight as [out, in].
    bound1 = 1.0 / (DIM ** 0.5)
    w1 = jax.random.uniform(k_w1, (HID, DIM), jnp.float32, -bound1, bound1)
    b1 = jax.random.uniform(k_b1, (HID,), jnp.float32, -bound1, bound1)

    # Linear(192 -> 1).
    bound2 = 1.0 / (HID ** 0.5)
    w2 = jax.random.uniform(k_w2, (1, HID), jnp.float32, -bound2, bound2)
    b2 = jax.random.uniform(k_b2, (1,), jnp.float32, -bound2, bound2)

    w1f, b1f, w2_row, b2p = prepare_head_params(gamma, beta, w1, b1, w2, b2)

    out = jax.block_until_ready(clit_head(pooled, w1f, b1f, w2_row, b2p))
    assert out.shape == (B, 1), out.shape

    # Tight check vs a reference using the same bf16 precision policy.
    ref_policy = _reference_policy(pooled, w1f, b1f, w2_row, b2p)
    assert jnp.allclose(out, ref_policy, atol=1e-3, rtol=1e-3), "mismatch vs bf16-policy reference"
    # Looser check vs the exact f32 torch-equivalent math (bf16 rounding tolerance).
    ref_f32 = _reference_torch(pooled_f32, gamma, beta, w1, b1, w2, b2)
    assert jnp.allclose(out, ref_f32, atol=5e-2, rtol=5e-2), "mismatch vs f32 torch reference"

    # Exercise the multi-tile grid with a ragged (partial) trailing tile — no wrapper-side pad.
    B2 = 20
    pooled2 = jax.random.normal(k_pool2, (B2, DIM), dtype=jnp.float32).astype(jnp.bfloat16)
    out2 = jax.block_until_ready(clit_head(pooled2, w1f, b1f, w2_row, b2p, block_b=16))
    ref2 = _reference_policy(pooled2, w1f, b1f, w2_row, b2p)
    assert out2.shape == (B2, 1), out2.shape
    assert jnp.allclose(out2, ref2, atol=1e-3, rtol=1e-3), "mismatch on multi-tile/partial-tile path"

    print("KERNEL_OK")
</pallas_src>

<mosaic_0001>
module attributes {stable_mosaic.version = 11 : i64} {
  func.func @_head_kernel(%arg0: i32, %arg1: memref<8x384xbf16, #tpu.memory_space<vmem>>, %arg2: memref<384x192xbf16, #tpu.memory_space<vmem>>, %arg3: memref<1x192xf32, #tpu.memory_space<vmem>>, %arg4: memref<1x192xf32, #tpu.memory_space<vmem>>, %arg5: memref<1xf32, #tpu.memory_space<smem>>, %arg6: memref<8x1xf32, #tpu.memory_space<vmem>>) attributes {dimension_semantics = [#tpu.dimension_semantics<parallel>], iteration_bounds = array<i64: 1>, scalar_prefetch = 0 : i64, scratch_operands = 0 : i64, tpu.core_type = #tpu.core_type<tc>, window_params = [{transform_indices = @transform_0, window_bounds = array<i64: 8, 384>}, {pipeline_mode = #tpu.pipeline_mode<synchronous>, transform_indices = @transform_1, window_bounds = array<i64: 384, 192>}, {pipeline_mode = #tpu.pipeline_mode<synchronous>, transform_indices = @transform_2, window_bounds = array<i64: 1, 192>}, {pipeline_mode = #tpu.pipeline_mode<synchronous>, transform_indices = @transform_3, window_bounds = array<i64: 1, 192>}, {transform_indices = @transform_4, window_bounds = array<i64: 1>}, {transform_indices = @transform_5, window_bounds = array<i64: 8, 1>}]} {
    %c0 = arith.constant 0 : index
    %c0_0 = arith.constant 0 : index
    %0 = vector.load %arg1[%c0, %c0_0] : memref<8x384xbf16, #tpu.memory_space<vmem>>, vector<8x384xbf16>
    %1 = arith.extf %0 : vector<8x384xbf16> to vector<8x384xf32>
    %cst = arith.constant dense<0.000000e+00> : vector<8xf32>
    %2 = vector.multi_reduction <add>, %1, %cst [1] : vector<8x384xf32> to vector<8xf32>
    %3 = vector.shape_cast %2 : vector<8xf32> to vector<8x1xf32>
    %cst_1 = arith.constant 3.840000e+02 : f32
    %4 = vector.broadcast %cst_1 : f32 to vector<8x1xf32>
    %5 = arith.divf %3, %4 : vector<8x1xf32>
    %6 = vector.broadcast %5 : vector<8x1xf32> to vector<8x384xf32>
    %7 = arith.subf %1, %6 : vector<8x384xf32>
    %8 = arith.mulf %7, %7 : vector<8x384xf32>
    %cst_2 = arith.constant dense<0.000000e+00> : vector<8xf32>
    %9 = vector.multi_reduction <add>, %8, %cst_2 [1] : vector<8x384xf32> to vector<8xf32>
    %10 = vector.shape_cast %9 : vector<8xf32> to vector<8x1xf32>
    %cst_3 = arith.constant 3.840000e+02 : f32
    %11 = vector.broadcast %cst_3 : f32 to vector<8x1xf32>
    %12 = arith.divf %10, %11 : vector<8x1xf32>
    %cst_4 = arith.constant 9.99999974E-6 : f32
    %13 = vector.broadcast %cst_4 : f32 to vector<8x1xf32>
    %14 = arith.addf %12, %13 : vector<8x1xf32>
    %15 = math.rsqrt %14 : vector<8x1xf32>
    %16 = vector.broadcast %15 : vector<8x1xf32> to vector<8x384xf32>
    %17 = arith.mulf %7, %16 : vector<8x384xf32>
    %18 = arith.truncf %17 : vector<8x384xf32> to vector<8x384xbf16>
    %c0_5 = arith.constant 0 : index
    %c0_6 = arith.constant 0 : index
    %19 = vector.load %arg2[%c0_5, %c0_6] : memref<384x192xbf16, #tpu.memory_space<vmem>>, vector<384x192xbf16>
    %cst_7 = arith.constant dense<0.000000e+00> : vector<8x192xf32>
    %20 = tpu.matmul %18, %19, %cst_7 {dimension_numbers = #tpu.dot_dimension_numbers<[1], [0], [0], [1], [0, 0, 1, 1], [], []>} : vector<8x384xbf16>, vector<384x192xbf16>, vector<8x192xf32> -> vector<8x192xf32>
    %c0_8 = arith.constant 0 : index
    %c0_9 = arith.constant 0 : index
    %21 = vector.load %arg3[%c0_8, %c0_9] : memref<1x192xf32, #tpu.memory_space<vmem>>, vector<1x192xf32>
    %22 = vector.broadcast %21 : vector<1x192xf32> to vector<8x192xf32>
    %23 = arith.addf %20, %22 : vector<8x192xf32>
    %cst_10 = arith.constant 0.000000e+00 : f32
    %24 = vector.broadcast %cst_10 : f32 to vector<8x192xf32>
    %25 = arith.maximumf %23, %24 : vector<8x192xf32>
    %c0_11 = arith.constant 0 : index
    %c0_12 = arith.constant 0 : index
    %26 = vector.load %arg4[%c0_11, %c0_12] : memref<1x192xf32, #tpu.memory_space<vmem>>, vector<1x192xf32>
    %27 = vector.broadcast %26 : vector<1x192xf32> to vector<8x192xf32>
    %28 = arith.mulf %25, %27 : vector<8x192xf32>
    %cst_13 = arith.constant dense<0.000000e+00> : vector<8xf32>
    %29 = vector.multi_reduction <add>, %28, %cst_13 [1] : vector<8x192xf32> to vector<8xf32>
    %30 = vector.shape_cast %29 : vector<8xf32> to vector<8x1xf32>
    %c0_14 = arith.constant 0 : index
    %31 = memref.load %arg5[%c0_14] : memref<1xf32, #tpu.memory_space<smem>>
    %32 = vector.broadcast %31 : f32 to vector<8x1xf32>
    %33 = arith.addf %30, %32 : vector<8x1xf32>
    %c0_15 = arith.constant 0 : index
    %c0_16 = arith.constant 0 : index
    %34 = vector.load %arg6[%c0_15, %c0_16] : memref<8x1xf32, #tpu.memory_space<vmem>>, vector<8x1xf32>
    tpu.vector_store %arg6[%c0_15, %c0_16], %33 {strides = array<i32>} : memref<8x1xf32, #tpu.memory_space<vmem>>, vector<8x1xf32>,
    return
  }
  func.func @transform_0(%arg0: i32) -> (i32, i32) {
    %c0_i32 = arith.constant 0 : i32
    %c0_i32_0 = arith.constant 0 : i32
    return %arg0, %c0_i32 : i32, i32
  }
  func.func @transform_1(%arg0: i32) -> (i32, i32) {
    %c0_i32 = arith.constant 0 : i32
    %c0_i32_0 = arith.constant 0 : i32
    %c0_i32_1 = arith.constant 0 : i32
    return %c0_i32, %c0_i32_0 : i32, i32
  }
  func.func @transform_2(%arg0: i32) -> (i32, i32) {
    %c0_i32 = arith.constant 0 : i32
    %c0_i32_0 = arith.constant 0 : i32
    %c0_i32_1 = arith.constant 0 : i32
    return %c0_i32, %c0_i32_0 : i32, i32
  }
  func.func @transform_3(%arg0: i32) -> (i32, i32) {
    %c0_i32 = arith.constant 0 : i32
    %c0_i32_0 = arith.constant 0 : i32
    %c0_i32_1 = arith.constant 0 : i32
    return %c0_i32, %c0_i32_0 : i32, i32
  }
  func.func @transform_4(%arg0: i32) -> i32 {
    %c0_i32 = arith.constant 0 : i32
    %c0_i32_0 = arith.constant 0 : i32
    return %c0_i32 : i32
  }
  func.func @transform_5(%arg0: i32) -> (i32, i32) {
    %c0_i32 = arith.constant 0 : i32
    %c0_i32_0 = arith.constant 0 : i32
    return %arg0, %c0_i32 : i32, i32
  }
}

</mosaic_0001>

<llo_original>
// kernel: tpu_custom_call.1
$region0: #{tpu_custom_call.1}
  #allocation0 [shape = 'u32[]', space=smem, size = 0x4, offset = 0x4, fixed_abs, tag = 'smem constant byte address 0x4 - core index']
  #allocation1 [shape = 'u32[72,128]{1,0:T(1,128)}', space=vmem, size = 0x9000, scoped, tag = 'internal scratch']
  #allocation2 [shape = 'f32[1]{0:T(128)S(6)}', space=smem, size = 0x200, scoped, tag = 'scoped memory for tpu_custom_call.1']
  %s0 = inlined_call_operand.vmem [shape: bf16[8,384], index: 0, kind: input, shape index: {}]
  %s1 = inlined_call_operand.vmem [shape: bf16[384,192], index: 1, kind: input, shape index: {}]
  %s2 = inlined_call_operand.vmem [shape: f32[1,192], index: 2, kind: input, shape index: {}]
  %s3 = inlined_call_operand.vmem [shape: f32[1,192], index: 3, kind: input, shape index: {}]
  %s4 = inlined_call_operand.<no memory space> [shape: f32[1], index: 4, kind: input, shape index: {}]
  %s5 = inlined_call_operand.vmem [shape: f32[8,1], index: 5, kind: output, shape index: {}]
  %s6 = sld [smem:[#allocation0]]
  $region30: #{tpu_custom_call.1} parent=0
    _
  %s8 = ssub.s32 1, %s6
  %s9 = scalar_select 0, %s8, %s6
  %10 = sst [smem:[#allocation2]] %s4
  // Predicated region
  $region2: #{tpu_custom_call.1} parent=0 // pred_check
    _
  $region3: #{tpu_custom_call.1} parent=0 // pred_check_branch
    %12 = sbr.rel (0) target = $region5
  $region4: #{tpu_custom_call.1} parent=0 // pred_region
    _
  $region5: #{tpu_custom_call.1} parent=0 // pred_fallthru
    _
  // Predicated region
  $region6: #{tpu_custom_call.1} parent=0 // pred_check
    _
  $region7: #{tpu_custom_call.1} parent=0 // pred_check_branch
    %14 = sbr.rel (0) target = $region9
  $region8: #{tpu_custom_call.1} parent=0 // pred_region
    _
  $region9: #{tpu_custom_call.1} parent=0 // pred_fallthru
    _
  // Predicated region
  $region10: #{tpu_custom_call.1} parent=0 // pred_check
    _
  $region11: #{tpu_custom_call.1} parent=0 // pred_check_branch
    %16 = sbr.rel (0) target = $region13
  $region12: #{tpu_custom_call.1} parent=0 // pred_region
    _
  $region13: #{tpu_custom_call.1} parent=0 // pred_fallthru
    _
  // Predicated region
  $region14: #{tpu_custom_call.1} parent=0 // pred_check
    _
  $region15: #{tpu_custom_call.1} parent=0 // pred_check_branch
    %18 = sbr.rel (0) target = $region17
  $region16: #{tpu_custom_call.1} parent=0 // pred_region
    _
  $region17: #{tpu_custom_call.1} parent=0 // pred_fallthru
    _
  // Predicated region
  $region18: #{tpu_custom_call.1} parent=0 // pred_check
    _
  $region19: #{tpu_custom_call.1} parent=0 // pred_check_branch
    %20 = sbr.rel (0) target = $region21
  $region20: #{tpu_custom_call.1} parent=0 // pred_region
    _
  $region21: #{tpu_custom_call.1} parent=0 // pred_fallthru
    _
  %v21 = vld [vmem:[%s0] sm:$0xff]
  %v22 = vld [vmem:[%s0 + $0x8] sm:$0xf]
  %v23 = vunpack.c.l.bf16 %v21
  %v24 = vunpack.c.h.bf16 %v21
  %v25 = vunpack.c.l.bf16 %v22
  %v26 = vadd.f32 %v23, %v24
  %v27 = vadd.f32 %v26, %v25
  %28 = vadd.xlane.f32.xlu0 %v27
  %v29 = vpop.xlane.xlu0 %28
  %v30 = vrcp.pop 384.0
  %v31 = vmul.f32 384.0, %v30
  %v32 = vsub.f32 1.0, %v31
  %v33 = vmul.f32 %v30, %v32
  %v34 = vadd.f32 %v30, %v33
  %vm35 = vweird.f32 %v30
  %v36 = vsel %vm35, %v30, %v34
  %v37 = vmul.f32 %v29, %v36
  %v38 = vsub.f32 %v23, %v37
  %v39 = vsub.f32 %v24, %v37
  %v40 = vsub.f32 %v25, %v37
  %v41 = vmul.f32 %v38, %v38
  %v42 = vmul.f32 %v39, %v39
  %v43 = vmul.f32 %v40, %v40
  %v44 = vadd.f32 %v41, %v42
  %v45 = vadd.f32 %v44, %v43
  %46 = vadd.xlane.f32.xlu0 %v45
  %v47 = vpop.xlane.xlu0 %46
  %v48 = vmul.f32 %v47, %v36
  %v49 = vadd.f32 %v48, 1e-05
  %v50 = vrsqrt.pop %v49
  %v51 = vmul.f32 %v50, %v49
  %v52 = vmul.f32 %v51, %v50
  %v53 = vmul.f32 0.5, %v52
  %v54 = vsub.f32 1.5, %v53
  %v55 = vmul.f32 %v50, %v54
  %vm56 = vweird.f32 %v49
  %vm57 = vweird.f32 %v50
  %vm58 = vmor %vm56, %vm57
  %v59 = vsel %vm58, %v50, %v55
  %v60 = vmul.f32 %v38, %v59
  %v61 = vmul.f32 %v39, %v59
  %v62 = vmul.f32 %v40, %v59
  %v63 = vpack.c.bf16 %v60, %v60
  %v64 = vpack.c.bf16 %v61, %v61
  %v65 = vpack.c.bf16 %v62, %v62
  %v66 = vld [vmem:[%s1] sm:$0xff]
  %v67 = vld [vmem:[%s1 + $0x8] sm:$0xff]
  %v68 = vld [vmem:[%s1 + $0x10] sm:$0xff]
  %v69 = vld [vmem:[%s1 + $0x18] sm:$0xff]
  %v70 = vld [vmem:[%s1 + $0x20] sm:$0xff]
  %v71 = vld [vmem:[%s1 + $0x28] sm:$0xff]
  %v72 = vld [vmem:[%s1 + $0x30] sm:$0xff]
  %v73 = vld [vmem:[%s1 + $0x38] sm:$0xff]
  %v74 = vld [vmem:[%s1 + $0x40] sm:$0xff]
  %v75 = vld [vmem:[%s1 + $0x48] sm:$0xff]
  %v76 = vld [vmem:[%s1 + $0x50] sm:$0xff]
  %v77 = vld [vmem:[%s1 + $0x58] sm:$0xff]
  %v78 = vld [vmem:[%s1 + $0x60] sm:$0xff]
  %v79 = vld [vmem:[%s1 + $0x68] sm:$0xff]
  %v80 = vld [vmem:[%s1 + $0x70] sm:$0xff]
  %v81 = vld [vmem:[%s1 + $0x78] sm:$0xff]
  %v82 = vld [vmem:[%s1 + $0x80] sm:$0xff]
  %v83 = vld [vmem:[%s1 + $0x88] sm:$0xff]
  %v84 = vld [vmem:[%s1 + $0x90] sm:$0xff]
  %v85 = vld [vmem:[%s1 + $0x98] sm:$0xff]
  %v86 = vld [vmem:[%s1 + $0xa0] sm:$0xff]
  %v87 = vld [vmem:[%s1 + $0xa8] sm:$0xff]
  %v88 = vld [vmem:[%s1 + $0xb0] sm:$0xff]
  %v89 = vld [vmem:[%s1 + $0xb8] sm:$0xff]
  %v90 = vld [vmem:[%s1 + $0xc0] sm:$0xff]
  %v91 = vld [vmem:[%s1 + $0xc8] sm:$0xff]
  %v92 = vld [vmem:[%s1 + $0xd0] sm:$0xff]
  %v93 = vld [vmem:[%s1 + $0xd8] sm:$0xff]
  %v94 = vld [vmem:[%s1 + $0xe0] sm:$0xff]
  %v95 = vld [vmem:[%s1 + $0xe8] sm:$0xff]
  %v96 = vld [vmem:[%s1 + $0xf0] sm:$0xff]
  %v97 = vld [vmem:[%s1 + $0xf8] sm:$0xff]
  %v98 = vld [vmem:[%s1 + $0x100] sm:$0xff]
  %v99 = vld [vmem:[%s1 + $0x108] sm:$0xff]
  %v100 = vld [vmem:[%s1 + $0x110] sm:$0xff]
  %v101 = vld [vmem:[%s1 + $0x118] sm:$0xff]
  %v102 = vld [vmem:[%s1 + $0x120] sm:$0xff]
  %v103 = vld [vmem:[%s1 + $0x128] sm:$0xff]
  %v104 = vld [vmem:[%s1 + $0x130] sm:$0xff]
  %v105 = vld [vmem:[%s1 + $0x138] sm:$0xff]
  %v106 = vld [vmem:[%s1 + $0x140] sm:$0xff]
  %v107 = vld [vmem:[%s1 + $0x148] sm:$0xff]
  %v108 = vld [vmem:[%s1 + $0x150] sm:$0xff]
  %v109 = vld [vmem:[%s1 + $0x158] sm:$0xff]
  %v110 = vld [vmem:[%s1 + $0x160] sm:$0xff]
  %v111 = vld [vmem:[%s1 + $0x168] sm:$0xff]
  %v112 = vld [vmem:[%s1 + $0x170] sm:$0xff]
  %v113 = vld [vmem:[%s1 + $0x178] sm:$0xff]
  %v114 = vld [vmem:[%s2] sm:$0x3]
  %v116 = vperm.slane %v114, 0
  %v117 = vperm.slane %v114, 1
  %v168 = vunpack.c.l.b16 %v66
  %v169 = vunpack.c.h.b16 %v66
  %v170 = vunpack.c.l.b16 %v67
  %v171 = vunpack.c.h.b16 %v67
  %v172 = vunpack.c.l.b16 %v68
  %v173 = vunpack.c.h.b16 %v68
  %v174 = vunpack.c.l.b16 %v69
  %v175 = vunpack.c.h.b16 %v69
  %v176 = vunpack.c.l.b16 %v70
  %v177 = vunpack.c.h.b16 %v70
  %v178 = vunpack.c.l.b16 %v71
  %v179 = vunpack.c.h.b16 %v71
  %v180 = vunpack.c.l.b16 %v72
  %v181 = vunpack.c.h.b16 %v72
  %v182 = vunpack.c.l.b16 %v73
  %v183 = vunpack.c.h.b16 %v73
  %v184 = vunpack.c.l.b16 %v74
  %v185 = vunpack.c.h.b16 %v74
  %v186 = vunpack.c.l.b16 %v75
  %v187 = vunpack.c.h.b16 %v75
  %v188 = vunpack.c.l.b16 %v76
  %v189 = vunpack.c.h.b16 %v76
  %v190 = vunpack.c.l.b16 %v77
  %v191 = vunpack.c.h.b16 %v77
  %v192 = vunpack.c.l.b16 %v78
  %v193 = vunpack.c.h.b16 %v78
  %v194 = vunpack.c.l.b16 %v79
  %v195 = vunpack.c.h.b16 %v79
  %v196 = vunpack.c.l.b16 %v80
  %v197 = vunpack.c.h.b16 %v80
  %v198 = vunpack.c.l.b16 %v81
  %v199 = vunpack.c.h.b16 %v81
  %v200 = vunpack.c.l.b16 %v82
  %v201 = vunpack.c.h.b16 %v82
  %v202 = vunpack.c.l.b16 %v83
  %v203 = vunpack.c.h.b16 %v83
  %v204 = vunpack.c.l.b16 %v84
  %v205 = vunpack.c.h.b16 %v84
  %v206 = vunpack.c.l.b16 %v85
  %v207 = vunpack.c.h.b16 %v85
  %v208 = vunpack.c.l.b16 %v86
  %v209 = vunpack.c.h.b16 %v86
  %v210 = vunpack.c.l.b16 %v87
  %v211 = vunpack.c.h.b16 %v87
  %v212 = vunpack.c.l.b16 %v88
  %v213 = vunpack.c.h.b16 %v88
  %v214 = vunpack.c.l.b16 %v89
  %v215 = vunpack.c.h.b16 %v89
  %v216 = vunpack.c.l.b16 %v90
  %v217 = vunpack.c.h.b16 %v90
  %v218 = vunpack.c.l.b16 %v91
  %v219 = vunpack.c.h.b16 %v91
  %v220 = vunpack.c.l.b16 %v92
  %v221 = vunpack.c.h.b16 %v92
  %v222 = vunpack.c.l.b16 %v93
  %v223 = vunpack.c.h.b16 %v93
  %v224 = vunpack.c.l.b16 %v94
  %v225 = vunpack.c.h.b16 %v94
  %v226 = vunpack.c.l.b16 %v95
  %v227 = vunpack.c.h.b16 %v95
  %v228 = vunpack.c.l.b16 %v96
  %v229 = vunpack.c.h.b16 %v96
  %v230 = vunpack.c.l.b16 %v97
  %v231 = vunpack.c.h.b16 %v97
  %v232 = vunpack.c.l.b16 %v98
  %v233 = vunpack.c.h.b16 %v98
  %v234 = vunpack.c.l.b16 %v99
  %v235 = vunpack.c.h.b16 %v99
  %v236 = vunpack.c.l.b16 %v100
  %v237 = vunpack.c.h.b16 %v100
  %v238 = vunpack.c.l.b16 %v101
  %v239 = vunpack.c.h.b16 %v101
  %v240 = vunpack.c.l.b16 %v102
  %v241 = vunpack.c.h.b16 %v102
  %v242 = vunpack.c.l.b16 %v103
  %v243 = vunpack.c.h.b16 %v103
  %v244 = vunpack.c.l.b16 %v104
  %v245 = vunpack.c.h.b16 %v104
  %v246 = vunpack.c.l.b16 %v105
  %v247 = vunpack.c.h.b16 %v105
  %v248 = vunpack.c.l.b16 %v106
  %v249 = vunpack.c.h.b16 %v106
  %v250 = vunpack.c.l.b16 %v107
  %v251 = vunpack.c.h.b16 %v107
  %v252 = vunpack.c.l.b16 %v108
  %v253 = vunpack.c.h.b16 %v108
  %v254 = vunpack.c.l.b16 %v109
  %v255 = vunpack.c.h.b16 %v109
  %v256 = vunpack.c.l.b16 %v110
  %v257 = vunpack.c.h.b16 %v110
  %v258 = vunpack.c.l.b16 %v111
  %v259 = vunpack.c.h.b16 %v111
  %v260 = vunpack.c.l.b16 %v112
  %v261 = vunpack.c.h.b16 %v112
  %v262 = vunpack.c.l.b16 %v113
  %v263 = vunpack.c.h.b16 %v113
  %v264 = vpack.c.b16 %v170, %v168
  %v265 = vpack.c.b16 %v171, %v169
  %v266 = vpack.c.b16 %v174, %v172
  %v267 = vpack.c.b16 %v175, %v173
  %v268 = vpack.c.b16 %v178, %v176
  %v269 = vpack.c.b16 %v179, %v177
  %v270 = vpack.c.b16 %v182, %v180
  %v271 = vpack.c.b16 %v183, %v181
  %v272 = vpack.c.b16 %v186, %v184
  %v273 = vpack.c.b16 %v187, %v185
  %v274 = vpack.c.b16 %v190, %v188
  %v275 = vpack.c.b16 %v191, %v189
  %v276 = vpack.c.b16 %v194, %v192
  %v277 = vpack.c.b16 %v195, %v193
  %v278 = vpack.c.b16 %v198, %v196
  %v279 = vpack.c.b16 %v199, %v197
  %v280 = vpack.c.b16 %v202, %v200
  %v281 = vpack.c.b16 %v203, %v201
  %v282 = vpack.c.b16 %v206, %v204
  %v283 = vpack.c.b16 %v207, %v205
  %v284 = vpack.c.b16 %v210, %v208
  %v285 = vpack.c.b16 %v211, %v209
  %v286 = vpack.c.b16 %v214, %v212
  %v287 = vpack.c.b16 %v215, %v213
  %v288 = vpack.c.b16 %v218, %v216
  %v289 = vpack.c.b16 %v219, %v217
  %v290 = vpack.c.b16 %v222, %v220
  %v291 = vpack.c.b16 %v223, %v221
  %v292 = vpack.c.b16 %v226, %v224
  %v293 = vpack.c.b16 %v227, %v225
  %v294 = vpack.c.b16 %v230, %v228
  %v295 = vpack.c.b16 %v231, %v229
  %v296 = vpack.c.b16 %v234, %v232
  %v297 = vpack.c.b16 %v235, %v233
  %v298 = vpack.c.b16 %v238, %v236
  %v299 = vpack.c.b16 %v239, %v237
  %v300 = vpack.c.b16 %v242, %v240
  %v301 = vpack.c.b16 %v243, %v241
  %v302 = vpack.c.b16 %v246, %v244
  %v303 = vpack.c.b16 %v247, %v245
  %v304 = vpack.c.b16 %v250, %v248
  %v305 = vpack.c.b16 %v251, %v249
  %v306 = vpack.c.b16 %v254, %v252
  %v307 = vpack.c.b16 %v255, %v253
  %v308 = vpack.c.b16 %v258, %v256
  %v309 = vpack.c.b16 %v259, %v257
  %v310 = vpack.c.b16 %v262, %v260
  %v311 = vpack.c.b16 %v263, %v261
  %360 = vmatpush.bf16.msra.mxu0 %v278
  %361 = vmatpush.bf16.msra.mxu0 %v276
  %362 = vmatpush.bf16.msra.mxu0 %v274
  %363 = vmatpush.bf16.msra.mxu0 %v272
  %364 = vmatpush.bf16.msra.mxu0 %v270
  %365 = vmatpush.bf16.msra.mxu0 %v268
  %366 = vmatpush.bf16.msra.mxu0 %v266
  %367 = vmatpush.bf16.msra.mxu0 %v264
  %368 = vmatmul.bf16.gmra.mxu0 %v63
  %v369 = vpop.f32.mrf.mxu0
  %v370 = vadd.f32 %v116, %v369
  %v371 = vpop.f32.mrf.mxu0
  %372 = vdwg.mxu0
  %373 = vmatpush.bf16.msra.mxu0 %v294
  %374 = vmatpush.bf16.msra.mxu0 %v292
  %375 = vmatpush.bf16.msra.mxu0 %v290
  %376 = vmatpush.bf16.msra.mxu0 %v288
  %377 = vmatpush.bf16.msra.mxu0 %v286
  %378 = vmatpush.bf16.msra.mxu0 %v284
  %379 = vmatpush.bf16.msra.mxu0 %v282
  %380 = vmatpush.bf16.msra.mxu0 %v280
  %381 = vmatmul.bf16.gmra.mxu0 %v64
  %v382 = vpop.f32.mrf.mxu0
  %v383 = vadd.f32 %v370, %v382
  %v384 = vpop.f32.mrf.mxu0
  %385 = vdwg.mxu0
  %386 = vmatpush.bf16.msra.mxu0 %v310
  %387 = vmatpush.bf16.msra.mxu0 %v308
  %388 = vmatpush.bf16.msra.mxu0 %v306
  %389 = vmatpush.bf16.msra.mxu0 %v304
  %390 = vmatpush.bf16.msra.mxu0 %v302
  %391 = vmatpush.bf16.msra.mxu0 %v300
  %392 = vmatpush.bf16.msra.mxu0 %v298
  %393 = vmatpush.bf16.msra.mxu0 %v296
  %394 = vmatmul.bf16.gmra.mxu0 %v65
  %v395 = vpop.f32.mrf.mxu0
  %v396 = vadd.f32 %v383, %v395
  %v397 = vpop.f32.mrf.mxu0
  %398 = vdwg.mxu0
  %399 = vmatpush.bf16.msra.mxu0 %v279
  %400 = vmatpush.bf16.msra.mxu0 %v277
  %401 = vmatpush.bf16.msra.mxu0 %v275
  %402 = vmatpush.bf16.msra.mxu0 %v273
  %403 = vmatpush.bf16.msra.mxu0 %v271
  %404 = vmatpush.bf16.msra.mxu0 %v269
  %405 = vmatpush.bf16.msra.mxu0 %v267
  %406 = vmatpush.bf16.msra.mxu0 %v265
  %407 = vmatmul.bf16.gmra.mxu0 %v63
  %v408 = vpop.f32.mrf.mxu0
  %v409 = vadd.f32 %v117, %v408
  %v410 = vpop.f32.mrf.mxu0
  %411 = vdwg.mxu0
  %412 = vmatpush.bf16.msra.mxu0 %v295
  %413 = vmatpush.bf16.msra.mxu0 %v293
  %414 = vmatpush.bf16.msra.mxu0 %v291
  %415 = vmatpush.bf16.msra.mxu0 %v289
  %416 = vmatpush.bf16.msra.mxu0 %v287
  %417 = vmatpush.bf16.msra.mxu0 %v285
  %418 = vmatpush.bf16.msra.mxu0 %v283
  %419 = vmatpush.bf16.msra.mxu0 %v281
  %420 = vmatmul.bf16.gmra.mxu0 %v64
  %v421 = vpop.f32.mrf.mxu0
  %v422 = vadd.f32 %v409, %v421
  %v423 = vpop.f32.mrf.mxu0
  %424 = vdwg.mxu0
  %425 = vmatpush.bf16.msra.mxu0 %v311
  %426 = vmatpush.bf16.msra.mxu0 %v309
  %427 = vmatpush.bf16.msra.mxu0 %v307
  %428 = vmatpush.bf16.msra.mxu0 %v305
  %429 = vmatpush.bf16.msra.mxu0 %v303
  %430 = vmatpush.bf16.msra.mxu0 %v301
  %431 = vmatpush.bf16.msra.mxu0 %v299
  %432 = vmatpush.bf16.msra.mxu0 %v297
  %433 = vmatmul.bf16.gmra.mxu0 %v65
  %v434 = vpop.f32.mrf.mxu0
  %v435 = vadd.f32 %v422, %v434
  %v436 = vpop.f32.mrf.mxu0
  %437 = vdwg.mxu0
  %v438 = vmax.f32 %v396, 0.0
  %v439 = vmax.f32 %v435, 0.0
  %v440 = vld [vmem:[%s3] sm:$0x3]
  %v442 = vperm.slane %v440, 0
  %v443 = vperm.slane %v440, 1
  %v446 = vmul.f32 %v438, %v442
  %v447 = vmul.f32 %v439, %v443
  %vm448 = vcmask 523264
  %v449 = vsel %vm448, %v447, 0.0
  %v450 = vadd.f32 %v446, %v449
  %451 = vadd.xlane.f32.xlu0 %v450
  %v452 = vpop.xlane.xlu0 %451
  %s453 = sld [smem:[#allocation2]]
  %v454 = vstv %s453
  %v455 = vadd.f32 %v452, %v454
  %vm456 = vcmask 7168
  %457 = vst.msk [vmem:[%s5] sm:$0xff] %vm456, %v455
  // Predicated region
  $region22: #{tpu_custom_call.1} parent=0 // pred_check
    _
  $region23: #{tpu_custom_call.1} parent=0 // pred_check_branch
    %459 = sbr.rel (0) target = $region25
  $region24: #{tpu_custom_call.1} parent=0 // pred_region
    _
  $region25: #{tpu_custom_call.1} parent=0 // pred_fallthru
    _
  // Predicated region
  $region26: #{tpu_custom_call.1} parent=0 // pred_check
    _
  $region27: #{tpu_custom_call.1} parent=0 // pred_check_branch
    %461 = sbr.rel (0) target = $region29
  $region28: #{tpu_custom_call.1} parent=0 // pred_region
    _
  $region29: #{tpu_custom_call.1} parent=0 // pred_fallthru
    _

</llo_original>
